<compile_context>
chip_gen: v7x
topology: tpu7x:2x2x1
jax: 0.10.0
libtpu: 0.0.40
codegen_flags: <defaults>
</compile_context>

<pallas_src>
import jax
import jax.numpy as jnp
import numpy as np
from jax.experimental import pallas as pl
from jax.experimental.pallas import tpu as pltpu


def _pick_seq_tile(seq_len: int) -> int:
    """Largest sequence tile (multiple of 8, divides S) up to 512; else the full S."""
    for ts in (512, 256, 128, 64, 32, 16, 8):
        if seq_len % ts == 0:
            return ts
    return seq_len


def _make_kernel(F, T, seq_tile, H, project):
    """Build the fused pooling(+projection) kernel body."""

    def kernel(*refs):
        if project:
            starts_ref, stops_ref, hidden_ref, w_ref, b_ref, out_ref, acc_ref, cnt_ref = refs
        else:
            starts_ref, stops_ref, hidden_ref, out_ref, acc_ref, cnt_ref = refs

        s_idx = pl.program_id(1)
        num_s = pl.num_programs(1)

        @pl.when(s_idx == 0)
        def _init():
            acc_ref[...] = jnp.zeros_like(acc_ref)
            cnt_ref[...] = jnp.zeros_like(cnt_ref)

        starts = starts_ref[0]                      # [F, T] int32
        stops = stops_ref[0]                        # [F, T] int32
        hidden = hidden_ref[0]                      # [seq_tile, H] f32

        # Build the union-of-spans token mask for this sequence tile on the fly.
        pos = jax.lax.broadcasted_iota(jnp.int32, (F, seq_tile), 1) + s_idx * seq_tile
        in_span = (pos >= starts[:, 0:1]) & (pos < stops[:, 0:1])
        for t in range(1, T):                       # T is small & static -> unrolled
            in_span = in_span | ((pos >= starts[:, t:t + 1]) & (pos < stops[:, t:t + 1]))
        mask = in_span.astype(jnp.float32)          # [F, seq_tile]

        # Masked sum over this sequence tile on the MXU; counts on the VPU/XLU.
        acc_ref[...] += jnp.dot(mask, hidden, preferred_element_type=jnp.float32)   # [F, H]
        cnt_ref[...] += jnp.sum(mask, axis=1, keepdims=True)                        # [F, 1]

        @pl.when(s_idx == num_s - 1)
        def _finalize():
            denom = jnp.maximum(cnt_ref[...], 1.0)              # clamp empty spans -> 0, no NaN
            pooled = acc_ref[...] * pl.reciprocal(denom)        # [F, H] masked mean
            if project:
                w = w_ref[...]                                  # [F*H, outsize]
                y = b_ref[...].astype(jnp.float32)              # [1, outsize]
                # x @ W without an in-kernel [F,H] -> [1,F*H] reshape: sum of F small matmuls.
                for f in range(F):
                    y = y + jnp.dot(pooled[f:f + 1, :], w[f * H:(f + 1) * H, :],
                                    preferred_element_type=jnp.float32)
                out_ref[0] = jnp.tanh(y)                        # [1, outsize] lane-dense
            else:
                out_ref[0] = pooled                             # [F, H]; wrapper views as [B, F*H]

    return kernel


def entity_pooler_forward(hidden, token_idxs, w, b, insize, outsize):
    """Forward pass of BaseEntityPooler (masked-mean pool_fn)."""
    assert token_idxs.ndim == 4, "token_idxs = [F, B, T, 2]"
    F, B, T, _ = token_idxs.shape
    _, S, H = hidden.shape
    assert F * H == insize

    hidden = hidden.astype(jnp.float32)
    # [F, B, T] -> [B, F, T] so each batch's spans arrive as one small VMEM block.
    starts = jnp.transpose(token_idxs[..., 0], (1, 0, 2)).astype(jnp.int32)
    stops = jnp.transpose(token_idxs[..., 1], (1, 0, 2)).astype(jnp.int32)

    seq_tile = _pick_seq_tile(S)
    grid = (B, S // seq_tile)
    project = (outsize != insize)

    span_spec = pl.BlockSpec((1, F, T), lambda bi, si: (bi, 0, 0))
    in_specs = [
        span_spec,                                                    # starts
        span_spec,                                                    # stops
        pl.BlockSpec((1, seq_tile, H), lambda bi, si: (bi, si, 0)),   # hidden tile
    ]
    operands = [starts, stops, hidden]

    if project:
        in_specs += [
            pl.BlockSpec((insize, outsize), lambda bi, si: (0, 0)),   # W (resident)
            pl.BlockSpec((1, outsize), lambda bi, si: (0, 0)),        # bias
        ]
        operands += [w.astype(jnp.float32), b.reshape(1, outsize).astype(jnp.float32)]
        out_shape = jax.ShapeDtypeStruct((B, 1, outsize), jnp.float32)
        out_spec = pl.BlockSpec((1, 1, outsize), lambda bi, si: (bi, 0, 0))
    else:
        out_shape = jax.ShapeDtypeStruct((B, F, H), jnp.float32)
        out_spec = pl.BlockSpec((1, F, H), lambda bi, si: (bi, 0, 0))

    flops = 2 * F * B * S * H + (2 * B * insize * outsize if project else 0)
    bytes_accessed = (
        B * S * H * 4
        + starts.size * 8
        + (insize * outsize * 4 + outsize * 4 if project else 0)
        + B * (outsize if project else insize) * 4
    )
    cost = pl.CostEstimate(
        flops=flops,
        transcendentals=(B * outsize if project else 0),
        bytes_accessed=bytes_accessed,
    )

    kernel = _make_kernel(F, T, seq_tile, H, project)
    out = pl.pallas_call(
        kernel,
        out_shape=out_shape,
        grid_spec=pltpu.PrefetchScalarGridSpec(
            num_scalar_prefetch=0,
            grid=grid,
            in_specs=in_specs,
            out_specs=out_spec,
            scratch_shapes=[
                pltpu.VMEM((F, H), jnp.float32),   # running masked sum
                pltpu.VMEM((F, 1), jnp.float32),   # running token counts
            ],
        ),
        compiler_params=pltpu.CompilerParams(
            dimension_semantics=("parallel", "arbitrary"),
            vmem_limit_bytes=32 * 1024 * 1024,
        ),
        cost_estimate=cost,
    )(*operands)

    if project:
        return out.reshape(B, outsize)
    # torch.cat([pooled_f], dim=1): group f occupies columns [f*H, (f+1)*H)
    return out.reshape(B, F * H)


def _reference_forward(hidden, token_idxs, w, b, insize, outsize):
    """Pure-JAX reference mirroring the PyTorch forward (masked-mean pool_fn)."""
    F, B, T, _ = token_idxs.shape
    _, S, H = hidden.shape
    pos = jnp.arange(S, dtype=jnp.int32)
    starts = token_idxs[..., 0]
    stops = token_idxs[..., 1]
    in_span = (pos[None, None, None, :] >= starts[..., None]) & \
              (pos[None, None, None, :] < stops[..., None])          # [F, B, T, S]
    mask = jnp.any(in_span, axis=2).astype(jnp.float32)              # [F, B, S]
    pooled_list = []
    for f in range(F):
        m = mask[f][:, :, None]                                      # [B, S, 1]
        summed = (hidden * m).sum(axis=1)                            # [B, H]
        denom = jnp.maximum(m.sum(axis=1), 1.0)
        pooled_list.append(summed / denom)
    all_pooled = jnp.concatenate(pooled_list, axis=1)                # [B, F*H]
    if outsize == insize:
        return all_pooled
    return jnp.tanh(all_pooled @ w + b)


if __name__ == "__main__":
    # Small deterministic shapes.
    B, S, H = 2, 16, 32       # batch, seq, hidden
    F, T = 2, 2               # entity groups, spans per entity
    insize = F * H            # 64 (Linear input feature size)
    outsize = 32              # != insize -> projection branch exercised

    key = jax.random.PRNGKey(0)
    k_h, k_w, k_b = jax.random.split(key, 3)

    hidden = jax.random.normal(k_h, (B, S, H), dtype=jnp.float32)

    # token_idxs[f, b, t] = (start, stop); all spans non-empty and within [0, S).
    token_idxs = jnp.array(
        [
            [  # entity group 0
                [[0, 3], [5, 7]],     # batch 0
                [[2, 4], [10, 12]],   # batch 1
            ],
            [  # entity group 1
                [[8, 11], [12, 14]],  # batch 0
                [[1, 2], [6, 9]],     # batch 1
            ],
        ],
        dtype=jnp.int32,
    )  # [F, B, T, 2]

    bound = 1.0 / np.sqrt(insize)
    w = jax.random.uniform(k_w, (insize, outsize), jnp.float32, -bound, bound)
    b = jax.random.uniform(k_b, (outsize,), jnp.float32, -bound, bound)

    # Projection path (outsize != insize -> Linear + Tanh, fused in-kernel).
    out = jax.block_until_ready(
        entity_pooler_forward(hidden, token_idxs, w, b, insize, outsize))
    ref = _reference_forward(hidden, token_idxs, w, b, insize, outsize)
    np.testing.assert_allclose(np.asarray(out), np.asarray(ref), rtol=1e-4, atol=1e-5)
    assert out.shape == (B, outsize)

    # Identity path (outsize == insize skips the output layer, as in the PyTorch module).
    w_id = jnp.zeros((insize, insize), jnp.float32)
    b_id = jnp.zeros((insize,), jnp.float32)
    out_id = jax.block_until_ready(
        entity_pooler_forward(hidden, token_idxs, w_id, b_id, insize, insize))
    ref_id = _reference_forward(hidden, token_idxs, w_id, b_id, insize, insize)
    np.testing.assert_allclose(np.asarray(out_id), np.asarray(ref_id), rtol=1e-4, atol=1e-5)
    assert out_id.shape == (B, insize)

    print("KERNEL_OK")
</pallas_src>

<mosaic_0001>
module attributes {stable_mosaic.version = 11 : i64} {
  func.func @kernel(%arg0: i32, %arg1: i32, %arg2: memref<1x2x2xi32, #tpu.memory_space<vmem>>, %arg3: memref<1x2x2xi32, #tpu.memory_space<vmem>>, %arg4: memref<1x16x32xf32, #tpu.memory_space<vmem>>, %arg5: memref<64x32xf32, #tpu.memory_space<vmem>>, %arg6: memref<1x32xf32, #tpu.memory_space<vmem>>, %arg7: memref<1x1x32xf32, #tpu.memory_space<vmem>>, %arg8: memref<2x32xf32, #tpu.memory_space<vmem>>, %arg9: memref<2x1xf32, #tpu.memory_space<vmem>>) attributes {dimension_semantics = [#tpu.dimension_semantics<parallel>, #tpu.dimension_semantics<arbitrary>], iteration_bounds = array<i64: 2, 1>, scalar_prefetch = 0 : i64, scratch_operands = 2 : i64, tpu.core_type = #tpu.core_type<tc>, window_params = [{transform_indices = @transform_0, window_bounds = array<i64: 1, 2, 2>}, {transform_indices = @transform_1, window_bounds = array<i64: 1, 2, 2>}, {transform_indices = @transform_2, window_bounds = array<i64: 1, 16, 32>}, {pipeline_mode = #tpu.pipeline_mode<synchronous>, transform_indices = @transform_3, window_bounds = array<i64: 64, 32>}, {pipeline_mode = #tpu.pipeline_mode<synchronous>, transform_indices = @transform_4, window_bounds = array<i64: 1, 32>}, {transform_indices = @transform_5, window_bounds = array<i64: 1, 1, 32>}]} {
    %c0_i32 = arith.constant 0 : i32
    %0 = arith.cmpi eq, %arg1, %c0_i32 : i32
    %1 = arith.extui %0 : i1 to i32
    %c0_i32_0 = arith.constant 0 : i32
    %2 = arith.cmpi ne, %1, %c0_i32_0 : i32
    scf.if %2 {
      %cst_20 = arith.constant 0.000000e+00 : f32
      %42 = vector.broadcast %cst_20 : f32 to vector<2x32xf32>
      %c0_21 = arith.constant 0 : index
      %c0_22 = arith.constant 0 : index
      %43 = vector.load %arg8[%c0_21, %c0_22] : memref<2x32xf32, #tpu.memory_space<vmem>>, vector<2x32xf32>
      tpu.vector_store %arg8[%c0_21, %c0_22], %42 {strides = array<i32>} : memref<2x32xf32, #tpu.memory_space<vmem>>, vector<2x32xf32>,
      %cst_23 = arith.constant 0.000000e+00 : f32
      %44 = vector.broadcast %cst_23 : f32 to vector<2x1xf32>
      %c0_24 = arith.constant 0 : index
      %c0_25 = arith.constant 0 : index
      %45 = vector.load %arg9[%c0_24, %c0_25] : memref<2x1xf32, #tpu.memory_space<vmem>>, vector<2x1xf32>
      tpu.vector_store %arg9[%c0_24, %c0_25], %44 {strides = array<i32>} : memref<2x1xf32, #tpu.memory_space<vmem>>, vector<2x1xf32>,
    } else {
    }
    %c0 = arith.constant 0 : index
    %c0_1 = arith.constant 0 : index
    %c0_2 = arith.constant 0 : index
    %3 = vector.load %arg2[%c0, %c0_1, %c0_2] : memref<1x2x2xi32, #tpu.memory_space<vmem>>, vector<1x2x2xi32>
    %4 = vector.shape_cast %3 : vector<1x2x2xi32> to vector<2x2xi32>
    %c0_3 = arith.constant 0 : index
    %c0_4 = arith.constant 0 : index
    %c0_5 = arith.constant 0 : index
    %5 = vector.load %arg3[%c0_3, %c0_4, %c0_5] : memref<1x2x2xi32, #tpu.memory_space<vmem>>, vector<1x2x2xi32>
    %6 = vector.shape_cast %5 : vector<1x2x2xi32> to vector<2x2xi32>
    %c0_6 = arith.constant 0 : index
    %c0_7 = arith.constant 0 : index
    %c0_8 = arith.constant 0 : index
    %7 = vector.load %arg4[%c0_6, %c0_7, %c0_8] : memref<1x16x32xf32, #tpu.memory_space<vmem>>, vector<1x16x32xf32>
    %8 = vector.shape_cast %7 : vector<1x16x32xf32> to vector<16x32xf32>
    %9 = tpu.iota {dimensions = array<i32: 1>} : vector<2x16xi32>
    %c16_i32 = arith.constant 16 : i32
    %10 = arith.muli %arg1, %c16_i32 : i32
    %11 = vector.broadcast %10 : i32 to vector<2x16xi32>
    %12 = arith.addi %9, %11 : vector<2x16xi32>
    %13 = vector.extract_strided_slice %4 {offsets = [0, 0], sizes = [2, 1], strides = [1, 1]} : vector<2x2xi32> to vector<2x1xi32>
    %14 = vector.broadcast %13 : vector<2x1xi32> to vector<2x16xi32>
    %15 = arith.cmpi sge, %12, %14 : vector<2x16xi32>
    %16 = vector.extract_strided_slice %6 {offsets = [0, 0], sizes = [2, 1], strides = [1, 1]} : vector<2x2xi32> to vector<2x1xi32>
    %17 = vector.broadcast %16 : vector<2x1xi32> to vector<2x16xi32>
    %18 = arith.cmpi slt, %12, %17 : vector<2x16xi32>
    %19 = arith.andi %15, %18 : vector<2x16xi1>
    %20 = vector.extract_strided_slice %4 {offsets = [0, 1], sizes = [2, 1], strides = [1, 1]} : vector<2x2xi32> to vector<2x1xi32>
    %21 = vector.broadcast %20 : vector<2x1xi32> to vector<2x16xi32>
    %22 = arith.cmpi sge, %12, %21 : vector<2x16xi32>
    %23 = vector.extract_strided_slice %6 {offsets = [0, 1], sizes = [2, 1], strides = [1, 1]} : vector<2x2xi32> to vector<2x1xi32>
    %24 = vector.broadcast %23 : vector<2x1xi32> to vector<2x16xi32>
    %25 = arith.cmpi slt, %12, %24 : vector<2x16xi32>
    %26 = arith.andi %22, %25 : vector<2x16xi1>
    %27 = arith.ori %19, %26 : vector<2x16xi1>
    %28 = arith.extui %27 : vector<2x16xi1> to vector<2x16xi32>
    %29 = arith.sitofp %28 : vector<2x16xi32> to vector<2x16xf32>
    %c0_9 = arith.constant 0 : index
    %c0_10 = arith.constant 0 : index
    %30 = vector.load %arg8[%c0_9, %c0_10] : memref<2x32xf32, #tpu.memory_space<vmem>>, vector<2x32xf32>
    %cst = arith.constant dense<0.000000e+00> : vector<2x32xf32>
    %31 = tpu.matmul %29, %8, %cst {dimension_numbers = #tpu.dot_dimension_numbers<[1], [0], [0], [1], [0, 0, 1, 1], [], []>} : vector<2x16xf32>, vector<16x32xf32>, vector<2x32xf32> -> vector<2x32xf32>
    %32 = arith.addf %30, %31 : vector<2x32xf32>
    %c0_11 = arith.constant 0 : index
    %c0_12 = arith.constant 0 : index
    %33 = vector.load %arg8[%c0_11, %c0_12] : memref<2x32xf32, #tpu.memory_space<vmem>>, vector<2x32xf32>
    tpu.vector_store %arg8[%c0_11, %c0_12], %32 {strides = array<i32>} : memref<2x32xf32, #tpu.memory_space<vmem>>, vector<2x32xf32>,
    %c0_13 = arith.constant 0 : index
    %c0_14 = arith.constant 0 : index
    %34 = vector.load %arg9[%c0_13, %c0_14] : memref<2x1xf32, #tpu.memory_space<vmem>>, vector<2x1xf32>
    %cst_15 = arith.constant dense<0.000000e+00> : vector<2xf32>
    %35 = vector.multi_reduction <add>, %29, %cst_15 [1] : vector<2x16xf32> to vector<2xf32>
    %36 = vector.shape_cast %35 : vector<2xf32> to vector<2x1xf32>
    %37 = arith.addf %34, %36 : vector<2x1xf32>
    %c0_16 = arith.constant 0 : index
    %c0_17 = arith.constant 0 : index
    %38 = vector.load %arg9[%c0_16, %c0_17] : memref<2x1xf32, #tpu.memory_space<vmem>>, vector<2x1xf32>
    tpu.vector_store %arg9[%c0_16, %c0_17], %37 {strides = array<i32>} : memref<2x1xf32, #tpu.memory_space<vmem>>, vector<2x1xf32>,
    %c0_i32_18 = arith.constant 0 : i32
    %39 = arith.cmpi eq, %arg1, %c0_i32_18 : i32
    %40 = arith.extui %39 : i1 to i32
    %c0_i32_19 = arith.constant 0 : i32
    %41 = arith.cmpi ne, %40, %c0_i32_19 : i32
    scf.if %41 {
      %c0_20 = arith.constant 0 : index
      %c0_21 = arith.constant 0 : index
      %42 = vector.load %arg9[%c0_20, %c0_21] : memref<2x1xf32, #tpu.memory_space<vmem>>, vector<2x1xf32>
      %cst_22 = arith.constant 1.000000e+00 : f32
      %43 = vector.broadcast %cst_22 : f32 to vector<2x1xf32>
      %44 = arith.maximumf %42, %43 : vector<2x1xf32>
      %c0_23 = arith.constant 0 : index
      %c0_24 = arith.constant 0 : index
      %45 = vector.load %arg8[%c0_23, %c0_24] : memref<2x32xf32, #tpu.memory_space<vmem>>, vector<2x32xf32>
      %46 = tpu.reciprocal %44 : vector<2x1xf32> -> vector<2x1xf32>
      %47 = vector.broadcast %46 : vector<2x1xf32> to vector<2x32xf32>
      %48 = arith.mulf %45, %47 : vector<2x32xf32>
      %c0_25 = arith.constant 0 : index
      %c0_26 = arith.constant 0 : index
      %49 = vector.load %arg5[%c0_25, %c0_26] : memref<64x32xf32, #tpu.memory_space<vmem>>, vector<64x32xf32>
      %c0_27 = arith.constant 0 : index
      %c0_28 = arith.constant 0 : index
      %50 = vector.load %arg6[%c0_27, %c0_28] : memref<1x32xf32, #tpu.memory_space<vmem>>, vector<1x32xf32>
      %51 = vector.extract_strided_slice %48 {offsets = [0, 0], sizes = [1, 32], strides = [1, 1]} : vector<2x32xf32> to vector<1x32xf32>
      %52 = vector.extract_strided_slice %49 {offsets = [0, 0], sizes = [32, 32], strides = [1, 1]} : vector<64x32xf32> to vector<32x32xf32>
      %cst_29 = arith.constant dense<0.000000e+00> : vector<1x32xf32>
      %53 = tpu.matmul %51, %52, %cst_29 {dimension_numbers = #tpu.dot_dimension_numbers<[1], [0], [0], [1], [0, 0, 1, 1], [], []>} : vector<1x32xf32>, vector<32x32xf32>, vector<1x32xf32> -> vector<1x32xf32>
      %54 = arith.addf %50, %53 : vector<1x32xf32>
      %55 = vector.extract_strided_slice %48 {offsets = [1, 0], sizes = [1, 32], strides = [1, 1]} : vector<2x32xf32> to vector<1x32xf32>
      %56 = vector.extract_strided_slice %49 {offsets = [32, 0], sizes = [32, 32], strides = [1, 1]} : vector<64x32xf32> to vector<32x32xf32>
      %cst_30 = arith.constant dense<0.000000e+00> : vector<1x32xf32>
      %57 = tpu.matmul %55, %56, %cst_30 {dimension_numbers = #tpu.dot_dimension_numbers<[1], [0], [0], [1], [0, 0, 1, 1], [], []>} : vector<1x32xf32>, vector<32x32xf32>, vector<1x32xf32> -> vector<1x32xf32>
      %58 = arith.addf %54, %57 : vector<1x32xf32>
      %59 = math.tanh %58 : vector<1x32xf32>
      %c0_31 = arith.constant 0 : index
      %c0_32 = arith.constant 0 : index
      %c0_33 = arith.constant 0 : index
      %60 = vector.load %arg7[%c0_31, %c0_32, %c0_33] : memref<1x1x32xf32, #tpu.memory_space<vmem>>, vector<1x1x32xf32>
      %61 = vector.shape_cast %60 : vector<1x1x32xf32> to vector<1x32xf32>
      %62 = vector.shape_cast %59 : vector<1x32xf32> to vector<1x1x32xf32>
      tpu.vector_store %arg7[%c0_31, %c0_32, %c0_33], %62 {strides = array<i32>} : memref<1x1x32xf32, #tpu.memory_space<vmem>>, vector<1x1x32xf32>,
    } else {
    }
    return
  }
  func.func @transform_0(%arg0: i32, %arg1: i32) -> (i32, i32, i32) {
    %c0_i32 = arith.constant 0 : i32
    %c0_i32_0 = arith.constant 0 : i32
    %c0_i32_1 = arith.constant 0 : i32
    return %arg0, %c0_i32, %c0_i32_0 : i32, i32, i32
  }
  func.func @transform_1(%arg0: i32, %arg1: i32) -> (i32, i32, i32) {
    %c0_i32 = arith.constant 0 : i32
    %c0_i32_0 = arith.constant 0 : i32
    %c0_i32_1 = arith.constant 0 : i32
    return %arg0, %c0_i32, %c0_i32_0 : i32, i32, i32
  }
  func.func @transform_2(%arg0: i32, %arg1: i32) -> (i32, i32, i32) {
    %c0_i32 = arith.constant 0 : i32
    %c0_i32_0 = arith.constant 0 : i32
    return %arg0, %arg1, %c0_i32 : i32, i32, i32
  }
  func.func @transform_3(%arg0: i32, %arg1: i32) -> (i32, i32) {
    %c0_i32 = arith.constant 0 : i32
    %c0_i32_0 = arith.constant 0 : i32
    %c0_i32_1 = arith.constant 0 : i32
    return %c0_i32, %c0_i32_0 : i32, i32
  }
  func.func @transform_4(%arg0: i32, %arg1: i32) -> (i32, i32) {
    %c0_i32 = arith.constant 0 : i32
    %c0_i32_0 = arith.constant 0 : i32
    %c0_i32_1 = arith.constant 0 : i32
    return %c0_i32, %c0_i32_0 : i32, i32
  }
  func.func @transform_5(%arg0: i32, %arg1: i32) -> (i32, i32, i32) {
    %c0_i32 = arith.constant 0 : i32
    %c0_i32_0 = arith.constant 0 : i32
    %c0_i32_1 = arith.constant 0 : i32
    return %arg0, %c0_i32, %c0_i32_0 : i32, i32, i32
  }
}

</mosaic_0001>

<llo_original>
// kernel: tpu_custom_call.1
$region0: #{tpu_custom_call.1}
  #allocation0 [shape = 'u32[]', space=smem, size = 0x4, offset = 0x4, fixed_abs, tag = 'smem constant byte address 0x4 - core index']
  #allocation1 [shape = 'u32[144,128]{1,0:T(1,128)}', space=vmem, size = 0x12000, scoped, tag = 'internal scratch']
  #allocation2 [shape = 'f32[2,32]{1,0:T(2,128)}', space=vmem, size = 0x400, scoped, tag = 'scratch operand']
  #allocation3 [shape = 'f32[2,1]{1,0:T(2,128)}', space=vmem, size = 0x400, scoped, tag = 'scratch operand']
  %s0 = inlined_call_operand.vmem [shape: s32[2,2,2], index: 0, kind: input, shape index: {}]
  %s1 = inlined_call_operand.vmem [shape: s32[2,2,2], index: 1, kind: input, shape index: {}]
  %s2 = inlined_call_operand.vmem [shape: f32[2,16,32], index: 2, kind: input, shape index: {}]
  %s3 = inlined_call_operand.vmem [shape: f32[64,32], index: 3, kind: input, shape index: {}]
  %s4 = inlined_call_operand.vmem [shape: f32[1,32], index: 4, kind: input, shape index: {}]
  %s5 = inlined_call_operand.hbm [shape: f32[2,1,32], index: 5, kind: output, shape index: {}]
  %s6 = sld [smem:[#allocation0]]
  $region61: #{tpu_custom_call.1} parent=0
    _
  %s8 = ssub.s32 1, %s6
  %s9 = scalar_select 0, %s8, %s6
  $region1: #{tpu_custom_call.1} parent=0
    #allocation4 [shape = 'u8[1024]{0}', space=vmem, size = 0x400, scoped, tag = 'output window, operand 0']
    #allocation5 [shape = 's32[2]{0}', space=sflag, size = 0x8, scoped, tag = 'scoped memory for tpu_custom_call.1']
    %10 = vsyncpa [#allocation5], 0
    %s11 = scalar_lea.sflag [#allocation5], 1
    %12 = vsyncpa %s11, 0
    loop: start=0, step=1, limit=4
    $region2: #{tpu_custom_call.1} parent=1 // loop_pre_header
      _
    $region3: #{tpu_custom_call.1} parent=1 // loop_header
      %s14 = sphi 0, %s18
      %p15 = scmp.ge.s32.totalorder %s14, 4
      %s21 = sphi 0, %s33
      %s22 = sphi 0, %s29
      %s23 = sphi 0, %s21
      %s24 = sphi 0, %s22
      %s25 = sphi 0, %s23
      %s26 = sphi 0, %s24
      %s36 = sphi 0, %s38
      %s39 = sphi 0, %s36
      %s40 = sphi 0, %s39
      %s56 = sphi 0, %s40
      %s62 = sphi 0, %s64
      %s65 = sphi 0, %s62
      %s66 = sphi 0, %s65
      %s82 = sphi 0, %s66
      %s90 = sphi 0, %s92
      %s93 = sphi 0, %s90
      %s94 = sphi 0, %s93
      %s110 = sphi 0, %s94
      %s114 = sphi 0, %s114
      %s116 = sphi 0, %s114
      %s117 = sphi 0, %s116
      %s131 = sphi 0, %s117
      %s135 = sphi 0, %s135
      %s137 = sphi 0, %s135
      %s138 = sphi 0, %s137
      %s152 = sphi 0, %s138
      %s158 = sphi 0, %s160
      %s161 = sphi 0, %s158
      %s162 = sphi 0, %s161
      %s178 = sphi 0, %s162
    $region4: #{tpu_custom_call.1} parent=1 // loop_header_branch
      %17 = sbr.rel (%p15) target = $region8
    $region5: #{tpu_custom_call.1} parent=1 // loop_body
      %s19 = ssub.s32 %s14, 1
      %s20 = ssub.s32 %s14, 2
      %s27 = sadd.s32 1, %s22
      %p28 = scmp.ge.s32.totalorder %s27, 1
      %s29 = scalar_select %p28, 0, %s27
      %s30 = sadd.s32 1, %s21
      %s31 = scalar_select %p28, %s30, %s21
      %p32 = scmp.ge.s32.totalorder %s31, 2
      %s33 = scalar_select %p32, 0, %s31
      %s34 = ssub.s32 %s21, %s33
      %p35 = scmp.eq.s32.totalorder %s34, 0
      %s37 = sadd.s32 %s36, 1
      %s38 = scalar_select %p35, %s36, %s37
      %p41 = pneg %p35
      %p42 = scmp.eq.s32.totalorder %s14, 1
      %p43 = por %p41, %p42
      %p44 = scmp.ne.s32.totalorder %s36, %s39
      %p45 = scmp.eq.s32.totalorder %s14, 0
      %p46 = por %p44, %p45
      %p47 = scmp.ne.s32.totalorder %s36, %s39
      %p48 = scmp.eq.s32.totalorder %s19, 1
      %p49 = por %p47, %p48
      %p50 = scmp.ne.s32.totalorder %s39, %s40
      %p51 = scmp.eq.s32.totalorder %s19, 0
      %p52 = por %p50, %p51
      %p53 = scmp.ne.s32.totalorder %s39, %s40
      %p54 = scmp.eq.s32.totalorder %s20, 1
      %p55 = por %p53, %p54
      %p57 = scmp.ne.s32.totalorder %s40, %s56
      %p58 = scmp.eq.s32.totalorder %s20, 0
      %p59 = por %p57, %p58
      %s60 = ssub.s32 %s21, %s33
      %p61 = scmp.eq.s32.totalorder %s60, 0
      %s63 = sadd.s32 %s62, 1
      %s64 = scalar_select %p61, %s62, %s63
      %p67 = pneg %p61
      %p68 = scmp.eq.s32.totalorder %s14, 1
      %p69 = por %p67, %p68
      %p70 = scmp.ne.s32.totalorder %s62, %s65
      %p71 = scmp.eq.s32.totalorder %s14, 0
      %p72 = por %p70, %p71
      %p73 = scmp.ne.s32.totalorder %s62, %s65
      %p74 = scmp.eq.s32.totalorder %s19, 1
      %p75 = por %p73, %p74
      %p76 = scmp.ne.s32.totalorder %s65, %s66
      %p77 = scmp.eq.s32.totalorder %s19, 0
      %p78 = por %p76, %p77
      %p79 = scmp.ne.s32.totalorder %s65, %s66
      %p80 = scmp.eq.s32.totalorder %s20, 1
      %p81 = por %p79, %p80
      %p83 = scmp.ne.s32.totalorder %s66, %s82
      %p84 = scmp.eq.s32.totalorder %s20, 0
      %p85 = por %p83, %p84
      %s86 = ssub.s32 %s21, %s33
      %s87 = ssub.s32 %s22, %s29
      %s88 = sor.u32 %s86, %s87
      %p89 = scmp.eq.s32.totalorder %s88, 0
      %s91 = sadd.s32 %s90, 1
      %s92 = scalar_select %p89, %s90, %s91
      %p95 = pneg %p89
      %p96 = scmp.eq.s32.totalorder %s14, 1
      %p97 = por %p95, %p96
      %p98 = scmp.ne.s32.totalorder %s90, %s93
      %p99 = scmp.eq.s32.totalorder %s14, 0
      %p100 = por %p98, %p99
      %p101 = scmp.ne.s32.totalorder %s90, %s93
      %p102 = scmp.eq.s32.totalorder %s19, 1
      %p103 = por %p101, %p102
      %p104 = scmp.ne.s32.totalorder %s93, %s94
      %p105 = scmp.eq.s32.totalorder %s19, 0
      %p106 = por %p104, %p105
      %p107 = scmp.ne.s32.totalorder %s93, %s94
      %p108 = scmp.eq.s32.totalorder %s20, 1
      %p109 = por %p107, %p108
      %p111 = scmp.ne.s32.totalorder %s94, %s110
      %p112 = scmp.eq.s32.totalorder %s20, 0
      %p113 = por %p111, %p112
      %s115 = sadd.s32 %s114, 1
      %p118 = scmp.eq.s32.totalorder %s14, 1
      %p119 = scmp.ne.s32.totalorder %s114, %s116
      %p120 = scmp.eq.s32.totalorder %s14, 0
      %p121 = por %p119, %p120
      %p122 = scmp.ne.s32.totalorder %s114, %s116
      %p123 = scmp.eq.s32.totalorder %s19, 1
      %p124 = por %p122, %p123
      %p125 = scmp.ne.s32.totalorder %s116, %s117
      %p126 = scmp.eq.s32.totalorder %s19, 0
      %p127 = por %p125, %p126
      %p128 = scmp.ne.s32.totalorder %s116, %s117
      %p129 = scmp.eq.s32.totalorder %s20, 1
      %p130 = por %p128, %p129
      %p132 = scmp.ne.s32.totalorder %s117, %s131
      %p133 = scmp.eq.s32.totalorder %s20, 0
      %p134 = por %p132, %p133
      %s136 = sadd.s32 %s135, 1
      %p139 = scmp.eq.s32.totalorder %s14, 1
      %p140 = scmp.ne.s32.totalorder %s135, %s137
      %p141 = scmp.eq.s32.totalorder %s14, 0
      %p142 = por %p140, %p141
      %p143 = scmp.ne.s32.totalorder %s135, %s137
      %p144 = scmp.eq.s32.totalorder %s19, 1
      %p145 = por %p143, %p144
      %p146 = scmp.ne.s32.totalorder %s137, %s138
      %p147 = scmp.eq.s32.totalorder %s19, 0
      %p148 = por %p146, %p147
      %p149 = scmp.ne.s32.totalorder %s137, %s138
      %p150 = scmp.eq.s32.totalorder %s20, 1
      %p151 = por %p149, %p150
      %p153 = scmp.ne.s32.totalorder %s138, %s152
      %p154 = scmp.eq.s32.totalorder %s20, 0
      %p155 = por %p153, %p154
      %s156 = ssub.s32 %s21, %s33
      %p157 = scmp.eq.s32.totalorder %s156, 0
      %s159 = sadd.s32 %s158, 1
      %s160 = scalar_select %p157, %s158, %s159
      %p163 = pneg %p157
      %p164 = scmp.eq.s32.totalorder %s14, 1
      %p165 = por %p163, %p164
      %p166 = scmp.ne.s32.totalorder %s158, %s161
      %p167 = scmp.eq.s32.totalorder %s14, 0
      %p168 = por %p166, %p167
      %p169 = scmp.ne.s32.totalorder %s158, %s161
      %p170 = scmp.eq.s32.totalorder %s19, 1
      %p171 = por %p169, %p170
      %p172 = scmp.ne.s32.totalorder %s161, %s162
      %p173 = scmp.eq.s32.totalorder %s19, 0
      %p174 = por %p172, %p173
      %p175 = scmp.ne.s32.totalorder %s161, %s162
      %p176 = scmp.eq.s32.totalorder %s20, 1
      %p177 = por %p175, %p176
      %p179 = scmp.ne.s32.totalorder %s162, %s178
      %p180 = scmp.eq.s32.totalorder %s20, 0
      %p181 = por %p179, %p180
      %p182 = scmp.le.s32.totalorder 1, %s14
      %p183 = scmp.lt.s32.totalorder %s14, 3
      %p184 = pnand %p182, %p183
      %p185 = pneg %p184
      // Predicated region
      $region9: #{tpu_custom_call.1} parent=5 // pred_check
        _
      $region10: #{tpu_custom_call.1} parent=5 // pred_check_branch
        %187 = sbr.rel (%p184) target = $region12
      $region11: #{tpu_custom_call.1} parent=5 // pred_region
        %s188 = ssub.s32 %s14, 1
        // Predicated region
        $region13: #{tpu_custom_call.1} parent=11 // pred_check
          %p189 = pneg %p127
        $region14: #{tpu_custom_call.1} parent=11 // pred_check_branch
          %191 = sbr.rel (%p189) target = $region16
        $region15: #{tpu_custom_call.1} parent=11 // pred_region
          _
        $region16: #{tpu_custom_call.1} parent=11 // pred_fallthru
          _
        // Predicated region
        $region17: #{tpu_custom_call.1} parent=11 // pred_check
          %p192 = pneg %p148
        $region18: #{tpu_custom_call.1} parent=11 // pred_check_branch
          %194 = sbr.rel (%p192) target = $region20
        $region19: #{tpu_custom_call.1} parent=11 // pred_region
          _
        $region20: #{tpu_custom_call.1} parent=11 // pred_fallthru
          _
      $region12: #{tpu_custom_call.1} parent=5 // pred_fallthru
        _
      %p195 = scmp.lt.s32.totalorder %s14, 2
      // Predicated region
      $region21: #{tpu_custom_call.1} parent=5 // pred_check
        %p196 = pneg %p195
      $region22: #{tpu_custom_call.1} parent=5 // pred_check_branch
        %198 = sbr.rel (%p196) target = $region24
      $region23: #{tpu_custom_call.1} parent=5 // pred_region
        // Predicated region
        $region25: #{tpu_custom_call.1} parent=23 // pred_check
          %p199 = pneg %p46
        $region26: #{tpu_custom_call.1} parent=23 // pred_check_branch
          %201 = sbr.rel (%p199) target = $region28
        $region27: #{tpu_custom_call.1} parent=23 // pred_region
          %p202 = scmp.lt.s32.totalorder %s21, 1
          %s203 = scalar_select %p202, %s21, 1
          %s204 = smul.addr %s203, 2
          %s205 = scalar_lea.vmem %s0, %s204
        $region28: #{tpu_custom_call.1} parent=23 // pred_fallthru
          _
        // Predicated region
        $region29: #{tpu_custom_call.1} parent=23 // pred_check
          %p206 = pneg %p72
        $region30: #{tpu_custom_call.1} parent=23 // pred_check_branch
          %208 = sbr.rel (%p206) target = $region32
        $region31: #{tpu_custom_call.1} parent=23 // pred_region
          %p209 = scmp.lt.s32.totalorder %s21, 1
          %s210 = scalar_select %p209, %s21, 1
          %s211 = smul.addr %s210, 2
          %s212 = scalar_lea.vmem %s1, %s211
        $region32: #{tpu_custom_call.1} parent=23 // pred_fallthru
          _
        // Predicated region
        $region33: #{tpu_custom_call.1} parent=23 // pred_check
          %p213 = pneg %p100
        $region34: #{tpu_custom_call.1} parent=23 // pred_check_branch
          %215 = sbr.rel (%p213) target = $region36
        $region35: #{tpu_custom_call.1} parent=23 // pred_region
          %s216 = smul.u32 2, %s22
          %p217 = scmp.lt.s32.totalorder %s21, 1
          %s218 = scalar_select %p217, %s21, 1
          %p219 = scmp.lt.s32.totalorder %s216, 1
          %s220 = scalar_select %p219, %s216, 1
          %s221 = smul.addr %s218, 2
          %s222 = sadd.s32 %s220, %s221
          %s223 = smul.addr %s222, 8
          %s224 = scalar_lea.vmem %s2, %s223
          %s225 = smul.u32 2, %s22
        $region36: #{tpu_custom_call.1} parent=23 // pred_fallthru
          _
      $region24: #{tpu_custom_call.1} parent=5 // pred_fallthru
        _
      %p226 = scmp.le.s32.totalorder 1, %s14
      %p227 = scmp.lt.s32.totalorder %s14, 3
      %p228 = pnand %p226, %p227
      %p229 = pneg %p228
      // Predicated region
      $region37: #{tpu_custom_call.1} parent=5 // pred_check
        _
      $region38: #{tpu_custom_call.1} parent=5 // pred_check_branch
        %231 = sbr.rel (%p228) target = $region40
      $region39: #{tpu_custom_call.1} parent=5 // pred_region
        %s232 = ssub.s32 %s14, 1
        %p233 = scmp.lt.s32.totalorder %s23, 1
        %s234 = scalar_select %p233, %s23, 1
        %s235 = smul.addr %s234, 2
        %s236 = scalar_lea.vmem %s0, %s235
        %p237 = pneg %p52
        %p238 = pneg %p49
        %p239 = scmp.lt.s32.totalorder %s23, 1
        %s240 = scalar_select %p239, %s23, 1
        %s241 = smul.addr %s240, 2
        %s242 = scalar_lea.vmem %s1, %s241
        %p243 = pneg %p78
        %p244 = pneg %p75
        %s245 = smul.u32 2, %s24
        %p246 = scmp.lt.s32.totalorder %s23, 1
        %s247 = scalar_select %p246, %s23, 1
        %p248 = scmp.lt.s32.totalorder %s245, 1
        %s249 = scalar_select %p248, %s245, 1
        %s250 = smul.addr %s247, 2
        %s251 = sadd.s32 %s249, %s250
        %s252 = smul.addr %s251, 8
        %s253 = scalar_lea.vmem %s2, %s252
        %p254 = pneg %p106
        %p255 = pneg %p103
        %p256 = pneg %p127
        %p257 = pneg %p124
        %p258 = pneg %p148
        %p259 = pneg %p145
        %p260 = pneg %p174
        %p261 = pneg %p171
        %s262 = sand.u32 %s161, 1
        %s263 = scalar_lea.sflag [#allocation5], %s262
        %s264 = sand.u32 %s161, 1
        %s265 = scalar_lea.vmem [#allocation4], %s264
        %p266 = scmp.lt.s32.totalorder %s23, 1
        %s267 = scalar_select %p266, %s23, 1
        %s268 = smul.addr %s267, 2
        %s269 = scalar_lea.vmem %s0, %s268
        %p270 = scmp.lt.s32.totalorder %s23, 1
        %s271 = scalar_select %p270, %s23, 1
        %s272 = smul.addr %s271, 2
        %s273 = scalar_lea.vmem %s1, %s272
        %s274 = smul.u32 2, %s24
        %p275 = scmp.lt.s32.totalorder %s23, 1
        %s276 = scalar_select %p275, %s23, 1
        %p277 = scmp.lt.s32.totalorder %s274, 1
        %s278 = scalar_select %p277, %s274, 1
        %s279 = smul.addr %s276, 2
        %s280 = sadd.s32 %s278, %s279
        %s281 = smul.addr %s280, 8
        %s282 = scalar_lea.vmem %s2, %s281
        %s283 = smul.u32 2, %s24
        %p284 = scmp.eq.s32.totalorder %s24, 0
        // Predicated region
        $region41: #{tpu_custom_call.1} parent=39 // pred_check
          %p285 = pneg %p284
        $region42: #{tpu_custom_call.1} parent=39 // pred_check_branch
          %287 = sbr.rel (%p285) target = $region44
        $region43: #{tpu_custom_call.1} parent=39 // pred_region
          %vm288 = vcmask 254976
          %289 = vst.msk [vmem:[#allocation2] sm:$0x3] %vm288, 0.0
          %vm290 = vcmask 1024
          %291 = vst.msk [vmem:[#allocation3] sm:$0x3] %vm290, 0.0
        $region44: #{tpu_custom_call.1} parent=39 // pred_fallthru
          _
        %v292 = vld [vmem:[%s269] sm:$0x3]
        %v293 = vld [vmem:[%s273] sm:$0x3]
        %v294 = vld [vmem:[%s282] sm:$0xff]
        %v295 = vld [vmem:[%s282 + $0x8] sm:$0xff]
        %v296 = vlaneseq
        %v297 = vand.u32 %v296, 127
        %s298 = smul.u32 %s24, 16
        %v299 = vstv %s298
        %v300 = vadd.s32 %v297, %v299
        %301 = vset.pattern.permute.xlu0 0
        %302 = vperm.xlu0 %301, %v292
        %v303 = vpop.permute.xlu0 %302
        %vm304 = vcmp.ge.s32.totalorder %v300, %v303
        %305 = vset.pattern.permute.xlu0 0
        %306 = vperm.xlu0 %305, %v293
        %v307 = vpop.permute.xlu0 %306
        %vm308 = vcmp.lt.s32.totalorder %v300, %v307
        %vm309 = vmand %vm304, %vm308
        %310 = vset.pattern.permute.xlu0 1
        %311 = vperm.xlu0 %310, %v292
        %v312 = vpop.permute.xlu0 %311
        %vm313 = vcmp.ge.s32.totalorder %v300, %v312
        %314 = vset.pattern.permute.xlu0 1
        %315 = vperm.xlu0 %314, %v293
        %v316 = vpop.permute.xlu0 %315
        %vm317 = vcmp.lt.s32.totalorder %v300, %v316
        %vm318 = vmand %vm313, %vm317
        %vm319 = vmor %vm309, %vm318
        %v320 = vsel %vm319, 1, 0
        %v321 = vcvt.s32.f32 %v320
        %v322 = vld [vmem:[#allocation2] sm:$0x3]
        %vm323 = vcmask 130048
        %v325 = vsel %vm323, %v321, 0
        %327 = vmatprep.subr.mxu0 0.0
        %328 = vmatpush1.msra.mxu0 %v294
        %329 = vmatprep.subr.mxu0 0.0
        %330 = vmatpush1.msra.mxu0 %v295
        %331 = vmatprep.subr.mxu0 0.0
        %332 = vmatpush1.msra.mxu0 0.0
        %333 = vmatprep.subr.mxu0 0.0
        %334 = vmatpush1.msra.mxu0 0.0
        %335 = vmatprep.subr.mxu0 0.0
        %336 = vmatpush1.msra.mxu0 0.0
        %337 = vmatprep.subr.mxu0 0.0
        %338 = vmatpush1.msra.mxu0 0.0
        %339 = vmatprep.subr.mxu0 0.0
        %340 = vmatpush1.msra.mxu0 0.0
        %341 = vmatprep.subr.mxu0 0.0
        %342 = vmatpush1.msra.mxu0 0.0
        %343 = vmatprep.subr.mxu0 0.0
        %344 = vmatpush1.msra.mxu0 0.0
        %345 = vmatprep.subr.mxu0 0.0
        %346 = vmatpush1.msra.mxu0 0.0
        %347 = vmatprep.subr.mxu0 0.0
        %348 = vmatpush1.msra.mxu0 0.0
        %349 = vmatprep.subr.mxu0 0.0
        %350 = vmatpush1.msra.mxu0 0.0
        %351 = vmatprep.subr.mxu0 0.0
        %352 = vmatpush1.msra.mxu0 0.0
        %353 = vmatprep.subr.mxu0 0.0
        %354 = vmatpush1.msra.mxu0 0.0
        %355 = vmatprep.subr.mxu0 0.0
        %356 = vmatpush1.msra.mxu0 0.0
        %357 = vmatprep.subr.mxu0 0.0
        %358 = vmatpush1.msra.mxu0 0.0
        %359 = vmatprep.subr.mxu0 0.0
        %360 = vmatpush1.msra.mxu0 0.0
        %361 = vmatprep.subr.mxu0 0.0
        %362 = vmatpush1.msra.mxu0 0.0
        %363 = vmatprep.subr.mxu0 0.0
        %364 = vmatpush1.msra.mxu0 0.0
        %365 = vmatprep.subr.mxu0 0.0
        %366 = vmatpush1.msra.mxu0 0.0
        %367 = vmatprep.subr.mxu0 0.0
        %368 = vmatpush1.msra.mxu0 0.0
        %369 = vmatprep.subr.mxu0 0.0
        %370 = vmatpush1.msra.mxu0 0.0
        %371 = vmatprep.subr.mxu0 0.0
        %372 = vmatpush1.msra.mxu0 0.0
        %373 = vmatprep.subr.mxu0 0.0
        %374 = vmatpush1.msra.mxu0 0.0
        %375 = vmatprep.subr.mxu0 0.0
        %376 = vmatpush1.msra.mxu0 0.0
        %377 = vmatprep.subr.mxu0 0.0
        %378 = vmatpush1.msra.mxu0 0.0
        %379 = vmatprep.subr.mxu0 0.0
        %380 = vmatpush1.msra.mxu0 0.0
        %381 = vmatprep.subr.mxu0 0.0
        %382 = vmatpush1.msra.mxu0 0.0
        %383 = vmatprep.subr.mxu0 0.0
        %384 = vmatpush1.msra.mxu0 0.0
        %385 = vmatprep.subr.mxu0 0.0
        %386 = vmatpush1.msra.mxu0 0.0
        %387 = vmatprep.subr.mxu0 0.0
        %388 = vmatpush1.msra.mxu0 0.0
        %389 = vmatprep.subr.mxu0 0.0
        %390 = vmatpush1.msra.mxu0 0.0
        %391 = vmatprep.mubr.f32.mxu0 0.0
        %392 = vmatmul.mubr.f32.gmra.mrb[0].mxu0 %v325
        %v393 = vpop.f32.mrb[0].mxu0
        %v394 = vadd.f32 0.0, %v393
        %v395 = vpop.f32.mrb[0].mxu0
        %396 = vdwg.mxu0
        %v397 = vadd.f32 %v322, %v394
        %vm398 = vcmask 254976
        %399 = vst.msk [vmem:[#allocation2] sm:$0x3] %vm398, %v397
        %v400 = vld [vmem:[#allocation3] sm:$0x3]
        %vm401 = vcmask 123904
        %v402 = vsel %vm401, %v321, 0.0
        %403 = vadd.xlane.f32.xlu0 %v402
        %v404 = vpop.xlane.xlu0 %403
        %v405 = vadd.f32 %v400, %v404
        %vm406 = vcmask 1024
        %407 = vst.msk [vmem:[#allocation3] sm:$0x3] %vm406, %v405
        // Predicated region
        $region45: #{tpu_custom_call.1} parent=39 // pred_check
          %p408 = pneg %p284
        $region46: #{tpu_custom_call.1} parent=39 // pred_check_branch
          %410 = sbr.rel (%p408) target = $region48
        $region47: #{tpu_custom_call.1} parent=39 // pred_region
          %v411 = vld [vmem:[#allocation3] sm:$0x3]
          %v412 = vmax.f32 %v411, 1.0
          %v413 = vld [vmem:[#allocation2] sm:$0x3]
          %v414 = vrcp.pop %v412
          %416 = vset.pattern.permute.xlu0 0
          %417 = vperm.xlu0 %416, %v414
          %v418 = vpop.permute.xlu0 %417
          %v420 = vmul.f32 %v413, %v418
          %v421 = vld [vmem:[%s3] sm:$0xff]
          %v422 = vld [vmem:[%s3 + $0x8] sm:$0xff]
          %v423 = vld [vmem:[%s3 + $0x10] sm:$0xff]
          %v424 = vld [vmem:[%s3 + $0x18] sm:$0xff]
          %v425 = vld [vmem:[%s3 + $0x20] sm:$0xff]
          %v426 = vld [vmem:[%s3 + $0x28] sm:$0xff]
          %v427 = vld [vmem:[%s3 + $0x30] sm:$0xff]
          %v428 = vld [vmem:[%s3 + $0x38] sm:$0xff]
          %v429 = vld [vmem:[%s4] sm:$0x1]
          %vm430 = vcmask 261120
          %v432 = vsel %vm430, %v420, 0
          %434 = vmatprep.subr.mxu0 0.0
          %435 = vmatpush1.msra.mxu0 %v421
          %436 = vmatprep.subr.mxu0 0.0
          %437 = vmatpush1.msra.mxu0 %v422
          %438 = vmatprep.subr.mxu0 0.0
          %439 = vmatpush1.msra.mxu0 %v423
          %440 = vmatprep.subr.mxu0 0.0
          %441 = vmatpush1.msra.mxu0 %v424
          %442 = vmatprep.subr.mxu0 0.0
          %443 = vmatpush1.msra.mxu0 0.0
          %444 = vmatprep.subr.mxu0 0.0
          %445 = vmatpush1.msra.mxu0 0.0
          %446 = vmatprep.subr.mxu0 0.0
          %447 = vmatpush1.msra.mxu0 0.0
          %448 = vmatprep.subr.mxu0 0.0
          %449 = vmatpush1.msra.mxu0 0.0
          %450 = vmatprep.subr.mxu0 0.0
          %451 = vmatpush1.msra.mxu0 0.0
          %452 = vmatprep.subr.mxu0 0.0
          %453 = vmatpush1.msra.mxu0 0.0
          %454 = vmatprep.subr.mxu0 0.0
          %455 = vmatpush1.msra.mxu0 0.0
          %456 = vmatprep.subr.mxu0 0.0
          %457 = vmatpush1.msra.mxu0 0.0
          %458 = vmatprep.subr.mxu0 0.0
          %459 = vmatpush1.msra.mxu0 0.0
          %460 = vmatprep.subr.mxu0 0.0
          %461 = vmatpush1.msra.mxu0 0.0
          %462 = vmatprep.subr.mxu0 0.0
          %463 = vmatpush1.msra.mxu0 0.0
          %464 = vmatprep.subr.mxu0 0.0
          %465 = vmatpush1.msra.mxu0 0.0
          %466 = vmatprep.subr.mxu0 0.0
          %467 = vmatpush1.msra.mxu0 0.0
          %468 = vmatprep.subr.mxu0 0.0
          %469 = vmatpush1.msra.mxu0 0.0
          %470 = vmatprep.subr.mxu0 0.0
          %471 = vmatpush1.msra.mxu0 0.0
          %472 = vmatprep.subr.mxu0 0.0
          %473 = vmatpush1.msra.mxu0 0.0
          %474 = vmatprep.subr.mxu0 0.0
          %475 = vmatpush1.msra.mxu0 0.0
          %476 = vmatprep.subr.mxu0 0.0
          %477 = vmatpush1.msra.mxu0 0.0
          %478 = vmatprep.subr.mxu0 0.0
          %479 = vmatpush1.msra.mxu0 0.0
          %480 = vmatprep.subr.mxu0 0.0
          %481 = vmatpush1.msra.mxu0 0.0
          %482 = vmatprep.subr.mxu0 0.0
          %483 = vmatpush1.msra.mxu0 0.0
          %484 = vmatprep.subr.mxu0 0.0
          %485 = vmatpush1.msra.mxu0 0.0
          %486 = vmatprep.subr.mxu0 0.0
          %487 = vmatpush1.msra.mxu0 0.0
          %488 = vmatprep.subr.mxu0 0.0
          %489 = vmatpush1.msra.mxu0 0.0
          %490 = vmatprep.subr.mxu0 0.0
          %491 = vmatpush1.msra.mxu0 0.0
          %492 = vmatprep.subr.mxu0 0.0
          %493 = vmatpush1.msra.mxu0 0.0
          %494 = vmatprep.subr.mxu0 0.0
          %495 = vmatpush1.msra.mxu0 0.0
          %496 = vmatprep.subr.mxu0 0.0
          %497 = vmatpush1.msra.mxu0 0.0
          %498 = vmatprep.mubr.f32.mxu0 0.0
          %499 = vmatmul.mubr.f32.gmra.mrb[0].mxu0 %v432
          %v500 = vpop.f32.mrb[0].mxu0
          %v501 = vadd.f32 0.0, %v500
          %v502 = vpop.f32.mrb[0].mxu0
          %503 = vdwg.mxu0
          %v504 = vadd.f32 %v429, %v501
          %v505 = vrot.slane %v420, 1
          %v506 = vsel %vm430, %v505, 0
          %508 = vmatprep.subr.mxu0 0.0
          %509 = vmatpush1.msra.mxu0 %v425
          %510 = vmatprep.subr.mxu0 0.0
          %511 = vmatpush1.msra.mxu0 %v426
          %512 = vmatprep.subr.mxu0 0.0
          %513 = vmatpush1.msra.mxu0 %v427
          %514 = vmatprep.subr.mxu0 0.0
          %515 = vmatpush1.msra.mxu0 %v428
          %516 = vmatprep.subr.mxu0 0.0
          %517 = vmatpush1.msra.mxu0 0.0
          %518 = vmatprep.subr.mxu0 0.0
          %519 = vmatpush1.msra.mxu0 0.0
          %520 = vmatprep.subr.mxu0 0.0
          %521 = vmatpush1.msra.mxu0 0.0
          %522 = vmatprep.subr.mxu0 0.0
          %523 = vmatpush1.msra.mxu0 0.0
          %524 = vmatprep.subr.mxu0 0.0
          %525 = vmatpush1.msra.mxu0 0.0
          %526 = vmatprep.subr.mxu0 0.0
          %527 = vmatpush1.msra.mxu0 0.0
          %528 = vmatprep.subr.mxu0 0.0
          %529 = vmatpush1.msra.mxu0 0.0
          %530 = vmatprep.subr.mxu0 0.0
          %531 = vmatpush1.msra.mxu0 0.0
          %532 = vmatprep.subr.mxu0 0.0
          %533 = vmatpush1.msra.mxu0 0.0
          %534 = vmatprep.subr.mxu0 0.0
          %535 = vmatpush1.msra.mxu0 0.0
          %536 = vmatprep.subr.mxu0 0.0
          %537 = vmatpush1.msra.mxu0 0.0
          %538 = vmatprep.subr.mxu0 0.0
          %539 = vmatpush1.msra.mxu0 0.0
          %540 = vmatprep.subr.mxu0 0.0
          %541 = vmatpush1.msra.mxu0 0.0
          %542 = vmatprep.subr.mxu0 0.0
          %543 = vmatpush1.msra.mxu0 0.0
          %544 = vmatprep.subr.mxu0 0.0
          %545 = vmatpush1.msra.mxu0 0.0
          %546 = vmatprep.subr.mxu0 0.0
          %547 = vmatpush1.msra.mxu0 0.0
          %548 = vmatprep.subr.mxu0 0.0
          %549 = vmatpush1.msra.mxu0 0.0
          %550 = vmatprep.subr.mxu0 0.0
          %551 = vmatpush1.msra.mxu0 0.0
          %552 = vmatprep.subr.mxu0 0.0
          %553 = vmatpush1.msra.mxu0 0.0
          %554 = vmatprep.subr.mxu0 0.0
          %555 = vmatpush1.msra.mxu0 0.0
          %556 = vmatprep.subr.mxu0 0.0
          %557 = vmatpush1.msra.mxu0 0.0
          %558 = vmatprep.subr.mxu0 0.0
          %559 = vmatpush1.msra.mxu0 0.0
          %560 = vmatprep.subr.mxu0 0.0
          %561 = vmatpush1.msra.mxu0 0.0
          %562 = vmatprep.subr.mxu0 0.0
          %563 = vmatpush1.msra.mxu0 0.0
          %564 = vmatprep.subr.mxu0 0.0
          %565 = vmatpush1.msra.mxu0 0.0
          %566 = vmatprep.subr.mxu0 0.0
          %567 = vmatpush1.msra.mxu0 0.0
          %568 = vmatprep.subr.mxu0 0.0
          %569 = vmatpush1.msra.mxu0 0.0
          %570 = vmatprep.subr.mxu0 0.0
          %571 = vmatpush1.msra.mxu0 0.0
          %572 = vmatprep.mubr.f32.mxu0 0.0
          %573 = vmatmul.mubr.f32.gmra.mrb[0].mxu0 %v506
          %v574 = vpop.f32.mrb[0].mxu0
          %v575 = vadd.f32 0.0, %v574
          %v576 = vpop.f32.mrb[0].mxu0
          %577 = vdwg.mxu0
          %v578 = vadd.f32 %v504, %v575
          %v579 = vtanh.pop %v578
          %vm580 = vcmask 253952
          %581 = vst.msk [vmem:[%s265] sm:$0x1] %vm580, %v579
        $region48: #{tpu_custom_call.1} parent=39 // pred_fallthru
          _
        %s582 = sand.u32 %s161, 1
        %s583 = scalar_lea.sflag [#allocation5], %s582
        %s584 = sand.u32 %s161, 1
        %s585 = scalar_lea.vmem [#allocation4], %s584
        // Predicated region
        $region49: #{tpu_custom_call.1} parent=39 // pred_check
          %p586 = pneg %p171
        $region50: #{tpu_custom_call.1} parent=39 // pred_check_branch
          %588 = sbr.rel (%p586) target = $region52
        $region51: #{tpu_custom_call.1} parent=39 // pred_region
          %s590 = ssub.s32 16, 16
          %591 = vsyncadd %s583, %s590
          %s592 = smul.addr %s23, 16
          %s593 = scalar_lea.hbm %s5, %s592
          %s595 = sshll.u32 %s585, 4
          %s596 = int_to_ptr.vmem [resolvable:$true] %s595
          %598 = dma.vmem_to_hbm [thread:$0]  %s596, 16, %s593, %s583
        $region52: #{tpu_custom_call.1} parent=39 // pred_fallthru
          _
      $region40: #{tpu_custom_call.1} parent=5 // pred_fallthru
        _
      %p599 = scmp.le.s32.totalorder 2, %s14
      // Predicated region
      $region53: #{tpu_custom_call.1} parent=5 // pred_check
        %p600 = pneg %p599
      $region54: #{tpu_custom_call.1} parent=5 // pred_check_branch
        %602 = sbr.rel (%p600) target = $region56
      $region55: #{tpu_custom_call.1} parent=5 // pred_region
        %s603 = ssub.s32 %s14, 2
        // Predicated region
        $region57: #{tpu_custom_call.1} parent=55 // pred_check
          %p604 = pneg %p177
        $region58: #{tpu_custom_call.1} parent=55 // pred_check_branch
          %606 = sbr.rel (%p604) target = $region60
        $region59: #{tpu_custom_call.1} parent=55 // pred_region
          %s607 = sand.u32 %s162, 1
          %s608 = scalar_lea.sflag [#allocation5], %s607
          %s609 = sand.u32 %s162, 1
          %s610 = scalar_lea.vmem [#allocation4], %s609
          %611 = dma.done %s608, 16
        $region60: #{tpu_custom_call.1} parent=55 // pred_fallthru
          _
      $region56: #{tpu_custom_call.1} parent=5 // pred_fallthru
        _
    $region6: #{tpu_custom_call.1} parent=1 // loop_footer
      %s18 = sadd.s32 1, %s14
    $region7: #{tpu_custom_call.1} parent=1 // loop_footer_branch
      %13 = sbr.rel target = $region3
    $region8: #{tpu_custom_call.1} parent=1 // loop_exit
      _
    %612 = vsyncpa [#allocation5], 1
    %s613 = scalar_lea.sflag [#allocation5], 1
    %614 = vsyncpa %s613, 1

</llo_original>
